<compile_context>
chip_gen: v6e
topology: v6e:2x2x1
jax: 0.10.0
libtpu: 0.0.40
codegen_flags: <defaults>
</compile_context>

<pallas_src>
import functools

import numpy as np
import jax
import jax.numpy as jnp
from jax.experimental import pallas as pl
from jax.experimental.pallas import tpu as pltpu


def _round_up(x, m):
    return (x + m - 1) // m * m


def _compute_indices(sample_points, x_grid):
    """Nearest-grid-point index per sample point (host side, init time).

    np.argmin returns the first minimum, matching torch.argmin tie-breaking.
    """
    xg = np.asarray(x_grid, dtype=np.float32)
    return [int(np.abs(xg - np.float32(xi)).argmin()) for xi in sample_points]


def _select_kernel(u_ref, onehot_ref, o_ref):
    # (TILE_R, N) @ (N, P) one-hot selection on the MXU: each output column is
    # 1.0 * u[:, idx_j] plus exact zeros, accumulated in f32.
    o_ref[...] = jnp.dot(
        u_ref[...], onehot_ref[...], preferred_element_type=jnp.float32
    ).astype(o_ref.dtype)


@functools.partial(jax.jit, static_argnames=("tile_r", "vmem_limit_bytes"))
def _qoi_forward(u, onehot, *, tile_r, vmem_limit_bytes):
    *lead, n = u.shape
    p = onehot.shape[1]
    r = int(np.prod(lead)) if lead else 1
    d = u.dtype.itemsize
    u2 = u.reshape(r, n)

    grid = (pl.cdiv(r, tile_r),)          # ragged last block: no jnp.pad copy
    cost = pl.CostEstimate(
        flops=2 * r * n * p,
        transcendentals=0,
        bytes_accessed=(r * n + r * p + n * p) * d,
    )

    out2 = pl.pallas_call(
        _select_kernel,
        out_shape=jax.ShapeDtypeStruct((r, p), u.dtype),
        grid=grid,
        in_specs=[
            pl.BlockSpec((tile_r, n), lambda i: (i, 0)),   # pipelined R tiles
            pl.BlockSpec((n, p), lambda i: (0, 0)),        # one-hot, constant block
        ],
        out_specs=pl.BlockSpec((tile_r, p), lambda i: (i, 0)),  # true-width output
        compiler_params=pltpu.CompilerParams(
            dimension_semantics=("parallel",),   # shard R over v7x's 2 TCs
            vmem_limit_bytes=vmem_limit_bytes,
        ),
        cost_estimate=cost,
    )(u2, onehot)
    return out2.reshape(*lead, p)


class QuantityOfInterest:
    """JAX/Pallas equivalent of the PyTorch QuantityOfInterest module."""

    def __init__(self, sample_points, x_grid, min_pallas_bytes=512 * 1024):
        self.sample_points = list(sample_points)
        self.x_grid = jnp.asarray(x_grid, dtype=jnp.float32)
        self.indices = _compute_indices(sample_points, np.asarray(x_grid))
        self.min_pallas_bytes = int(min_pallas_bytes)

        self._n = int(self.x_grid.shape[0])
        self._p = len(self.indices)
        self._idx_dev = jnp.asarray(self.indices, dtype=jnp.int32)  # XLA fallback

        # One-hot selection matrix (N, P): column j picks grid index indices[j].
        onehot = np.zeros((self._n, self._p), dtype=np.float32)
        for j, idx in enumerate(self.indices):
            onehot[idx, j] = 1.0
        self._onehot_np = onehot
        self._onehot_cache = {}   # dtype name -> resident device array

        # Generation-aware VMEM budget: 64 MiB/TC on v7x, 128 MiB on v5e/v6e.
        try:
            cap = int(pltpu.get_tpu_info().vmem_capacity_bytes)
        except Exception:
            cap = 64 * 1024 * 1024        # conservative (v7x per-TC) default
        self._vmem_budget = int(min(cap * 3 // 4, 64 * 1024 * 1024))

    def _onehot(self, dtype):
        key = jnp.dtype(dtype).name
        if key not in self._onehot_cache:
            self._onehot_cache[key] = jnp.asarray(self._onehot_np, dtype=dtype)
        return self._onehot_cache[key]

    def _xla_gather(self, u):
        return u[..., self._idx_dev]

    def __call__(self, u):
        *lead, n = u.shape
        assert n == self._n, "last axis of u must match the grid size"
        r = int(np.prod(lead)) if lead else 1
        p = self._p
        dtype = jnp.dtype(u.dtype)

        # Fallback 1: dtypes the one-hot MXU path cannot reproduce exactly
        # (ints / f64; v7x has no integer MXU datapath) -> exact XLA gather.
        if dtype not in (jnp.dtype(jnp.float32), jnp.dtype(jnp.bfloat16)):
            return self._xla_gather(u)

        d = dtype.itemsize
        # Fallback 2: tiny inputs — pallas_call launch + pipeline warmup
        # dominates; XLA's fused gather is faster there.
        if r * n * d < max(self.min_pallas_bytes, 1):
            return self._xla_gather(u)

        # TILE_R from the VMEM budget: double-buffered input + output tiles,
        # double-buffered resident one-hot, 4 MiB headroom for compiler scratch.
        row_align = 8 if d == 4 else 16
        per_row = 2 * (n + p) * d
        avail = self._vmem_budget - 2 * n * p * d - 4 * 1024 * 1024
        tile_r = (avail // per_row) // row_align * row_align if avail > 0 else 0
        if tile_r < row_align:
            # TODO(synk): add a K-split grid axis over N with an f32 VMEM
            # accumulator (P3 pattern) for extremely wide grids instead of
            # falling back to the XLA gather.
            return self._xla_gather(u)
        tile_r = min(tile_r, _round_up(r, row_align))

        return _qoi_forward(
            u, self._onehot(dtype),
            tile_r=int(tile_r),
            vmem_limit_bytes=int(self._vmem_budget),
        )


if __name__ == "__main__":
    # Deterministic setup (no checkpoints, everything built in-script).
    key = jax.random.PRNGKey(0)

    n_grid = 16
    x_grid = jnp.linspace(0.0, 1.0, n_grid)                 # 1-D spatial grid
    sample_points = [0.10, 0.33, 0.50, 0.77, 0.90]           # QoI sample locations

    # min_pallas_bytes=0 forces the Pallas path at this tiny demo size
    # (the default routes sub-512 KiB inputs to XLA's fused gather instead).
    qoi = QuantityOfInterest(sample_points, x_grid, min_pallas_bytes=0)

    # u has arbitrary leading dims; last dim is the grid axis (like PyTorch).
    u = jax.random.normal(key, (2, 4, n_grid), dtype=jnp.float32)

    out = qoi(u)
    out = jax.block_until_ready(out)

    # Reference check (pure JAX gather) — same semantics as u[..., indices].
    ref = u[..., jnp.asarray(qoi.indices)]
    assert out.shape == (2, 4, len(sample_points))
    assert np.allclose(np.asarray(out), np.asarray(ref), rtol=1e-6, atol=1e-6), \
        "mismatch vs reference"

    print("KERNEL_OK")
</pallas_src>

<mosaic_0001>
module attributes {stable_mosaic.version = 11 : i64} {
  func.func @_select_kernel(%arg0: i32, %arg1: memref<8x16xf32, #tpu.memory_space<vmem>>, %arg2: memref<16x5xf32, #tpu.memory_space<vmem>>, %arg3: memref<8x5xf32, #tpu.memory_space<vmem>>) attributes {dimension_semantics = [#tpu.dimension_semantics<parallel>], iteration_bounds = array<i64: 1>, scalar_prefetch = 0 : i64, scratch_operands = 0 : i64, tpu.core_type = #tpu.core_type<tc>, window_params = [{transform_indices = @transform_0, window_bounds = array<i64: 8, 16>}, {pipeline_mode = #tpu.pipeline_mode<synchronous>, transform_indices = @transform_1, window_bounds = array<i64: 16, 5>}, {transform_indices = @transform_2, window_bounds = array<i64: 8, 5>}]} {
    %c0 = arith.constant 0 : index
    %c0_0 = arith.constant 0 : index
    %0 = vector.load %arg1[%c0, %c0_0] : memref<8x16xf32, #tpu.memory_space<vmem>>, vector<8x16xf32>
    %c0_1 = arith.constant 0 : index
    %c0_2 = arith.constant 0 : index
    %1 = vector.load %arg2[%c0_1, %c0_2] : memref<16x5xf32, #tpu.memory_space<vmem>>, vector<16x5xf32>
    %cst = arith.constant dense<0.000000e+00> : vector<8x5xf32>
    %2 = tpu.matmul %0, %1, %cst {dimension_numbers = #tpu.dot_dimension_numbers<[1], [0], [0], [1], [0, 0, 1, 1], [], []>} : vector<8x16xf32>, vector<16x5xf32>, vector<8x5xf32> -> vector<8x5xf32>
    %c0_3 = arith.constant 0 : index
    %c0_4 = arith.constant 0 : index
    %3 = vector.load %arg3[%c0_3, %c0_4] : memref<8x5xf32, #tpu.memory_space<vmem>>, vector<8x5xf32>
    tpu.vector_store %arg3[%c0_3, %c0_4], %2 {strides = array<i32>} : memref<8x5xf32, #tpu.memory_space<vmem>>, vector<8x5xf32>,
    return
  }
  func.func @transform_0(%arg0: i32) -> (i32, i32) {
    %c0_i32 = arith.constant 0 : i32
    %c0_i32_0 = arith.constant 0 : i32
    return %arg0, %c0_i32 : i32, i32
  }
  func.func @transform_1(%arg0: i32) -> (i32, i32) {
    %c0_i32 = arith.constant 0 : i32
    %c0_i32_0 = arith.constant 0 : i32
    %c0_i32_1 = arith.constant 0 : i32
    return %c0_i32, %c0_i32_0 : i32, i32
  }
  func.func @transform_2(%arg0: i32) -> (i32, i32) {
    %c0_i32 = arith.constant 0 : i32
    %c0_i32_0 = arith.constant 0 : i32
    return %arg0, %c0_i32 : i32, i32
  }
}

</mosaic_0001>

<llo_original>
// kernel: _qoi_forward.1
$region0: #{_qoi_forward.1}
  #allocation0 [shape = 'u32[]', space=smem, size = 0x4, offset = 0x4, fixed_abs, tag = 'smem constant byte address 0x4 - core index']
  #allocation1 [shape = 'u32[144,128]{1,0:T(1,128)}', space=vmem, size = 0x12000, scoped, tag = 'internal scratch']
  %s0 = inlined_call_operand.vmem [shape: f32[8,16], index: 0, kind: input, shape index: {}]
  %s1 = inlined_call_operand.vmem [shape: f32[16,5], index: 1, kind: input, shape index: {}]
  %s2 = inlined_call_operand.hbm [shape: f32[8,5], index: 2, kind: output, shape index: {}]
  %s3 = sld [smem:[#allocation0]]
  $region18: #{_qoi_forward.1} parent=0
    _
  %s5 = ssub.s32 1, %s3
  %s6 = scalar_select 0, %s5, %s3
  $region1: #{_qoi_forward.1} parent=0
    #allocation2 [shape = 'u8[4096]{0}', space=vmem, size = 0x1000, scoped, tag = 'output window, operand 0, single buffered']
    #allocation3 [shape = 's32[1]{0}', space=sflag, size = 0x4, scoped, tag = 'scoped memory for _qoi_forward.1']
    %7 = vsyncpa [#allocation3], 0
    // Predicated region
    $region2: #{_qoi_forward.1} parent=1 // pred_check
      _
    $region3: #{_qoi_forward.1} parent=1 // pred_check_branch
      %9 = sbr.rel (0) target = $region5
    $region4: #{_qoi_forward.1} parent=1 // pred_region
      _
    $region5: #{_qoi_forward.1} parent=1 // pred_fallthru
      _
    // Predicated region
    $region6: #{_qoi_forward.1} parent=1 // pred_check
      _
    $region7: #{_qoi_forward.1} parent=1 // pred_check_branch
      %11 = sbr.rel (0) target = $region9
    $region8: #{_qoi_forward.1} parent=1 // pred_region
      _
    $region9: #{_qoi_forward.1} parent=1 // pred_fallthru
      _
    %v12 = vld [vmem:[%s0] sm:$0xff]
    %v13 = vld [vmem:[%s1] sm:$0xff]
    %v14 = vld [vmem:[%s1 + $0x8] sm:$0xff]
    %vm15 = vcmask 130048
    %v17 = vsel %vm15, %v12, 0
    %19 = vmatprep.subr.mxu0 0.0
    %20 = vmatpush1.msra.mxu0 0.0
    %21 = vmatprep.subr.mxu0 0.0
    %22 = vmatpush1.msra.mxu0 0.0
    %23 = vmatprep.subr.mxu0 0.0
    %24 = vmatpush1.msra.mxu0 0.0
    %25 = vmatprep.subr.mxu0 0.0
    %26 = vmatpush1.msra.mxu0 0.0
    %27 = vmatprep.subr.mxu0 0.0
    %28 = vmatpush1.msra.mxu0 0.0
    %29 = vmatprep.subr.mxu0 0.0
    %30 = vmatpush1.msra.mxu0 0.0
    %31 = vmatprep.subr.mxu0 0.0
    %32 = vmatpush1.msra.mxu0 0.0
    %33 = vmatprep.subr.mxu0 0.0
    %34 = vmatpush1.msra.mxu0 0.0
    %35 = vmatprep.subr.mxu0 0.0
    %36 = vmatpush1.msra.mxu0 0.0
    %37 = vmatprep.subr.mxu0 0.0
    %38 = vmatpush1.msra.mxu0 0.0
    %39 = vmatprep.subr.mxu0 0.0
    %40 = vmatpush1.msra.mxu0 0.0
    %41 = vmatprep.subr.mxu0 0.0
    %42 = vmatpush1.msra.mxu0 0.0
    %43 = vmatprep.subr.mxu0 0.0
    %44 = vmatpush1.msra.mxu0 0.0
    %45 = vmatprep.subr.mxu0 0.0
    %46 = vmatpush1.msra.mxu0 0.0
    %47 = vmatprep.subr.mxu0 0.0
    %48 = vmatpush1.msra.mxu0 %v14
    %49 = vmatprep.subr.mxu0 0.0
    %50 = vmatpush1.msra.mxu0 %v13
    %51 = vmatprep.subr.mxu0 0.0
    %52 = vmatpush2.msra.mxu0 0.0
    %53 = vmatprep.subr.mxu0 0.0
    %54 = vmatpush2.msra.mxu0 0.0
    %55 = vmatprep.subr.mxu0 0.0
    %56 = vmatpush2.msra.mxu0 0.0
    %57 = vmatprep.subr.mxu0 0.0
    %58 = vmatpush2.msra.mxu0 0.0
    %59 = vmatprep.subr.mxu0 0.0
    %60 = vmatpush2.msra.mxu0 0.0
    %61 = vmatprep.subr.mxu0 0.0
    %62 = vmatpush2.msra.mxu0 0.0
    %63 = vmatprep.subr.mxu0 0.0
    %64 = vmatpush2.msra.mxu0 0.0
    %65 = vmatprep.subr.mxu0 0.0
    %66 = vmatpush2.msra.mxu0 0.0
    %67 = vmatprep.subr.mxu0 0.0
    %68 = vmatpush2.msra.mxu0 0.0
    %69 = vmatprep.subr.mxu0 0.0
    %70 = vmatpush2.msra.mxu0 0.0
    %71 = vmatprep.subr.mxu0 0.0
    %72 = vmatpush2.msra.mxu0 0.0
    %73 = vmatprep.subr.mxu0 0.0
    %74 = vmatpush2.msra.mxu0 0.0
    %75 = vmatprep.subr.mxu0 0.0
    %76 = vmatpush2.msra.mxu0 0.0
    %77 = vmatprep.subr.mxu0 0.0
    %78 = vmatpush2.msra.mxu0 0.0
    %79 = vmatprep.subr.mxu0 0.0
    %80 = vmatpush2.msra.mxu0 0.0
    %81 = vmatprep.subr.mxu0 0.0
    %82 = vmatpush2.msra.mxu0 0.0
    %83 = vmatprep.mubr.f32.mxu0 0.0
    %84 = vmatmul.mubr.f32.gmra.mxu0 %v17
    %v85 = vpop.f32.mrf.mxu0
    %v86 = vadd.f32 0.0, %v85
    %v87 = vpop.f32.mrf.mxu0
    %88 = vdwg.mxu0
    %vm89 = vcmask 39936
    %90 = vst.msk [vmem:[#allocation2] sm:$0xff] %vm89, %v86
    // Predicated region
    $region10: #{_qoi_forward.1} parent=1 // pred_check
      _
    $region11: #{_qoi_forward.1} parent=1 // pred_check_branch
      %92 = sbr.rel (0) target = $region13
    $region12: #{_qoi_forward.1} parent=1 // pred_region
      %s94 = ssub.s32 128, 128
      %95 = vsyncadd [#allocation3], %s94
      %s97 = sshll.u32 [#allocation2], 4
      %s98 = int_to_ptr.vmem [resolvable:$true] %s97
      %100 = dma.vmem_to_hbm [thread:$0]  %s98, 128, %s2, [#allocation3]
    $region13: #{_qoi_forward.1} parent=1 // pred_fallthru
      _
    // Predicated region
    $region14: #{_qoi_forward.1} parent=1 // pred_check
      _
    $region15: #{_qoi_forward.1} parent=1 // pred_check_branch
      %102 = sbr.rel (0) target = $region17
    $region16: #{_qoi_forward.1} parent=1 // pred_region
      %103 = dma.done [#allocation3], 128
    $region17: #{_qoi_forward.1} parent=1 // pred_fallthru
      _
    %104 = vsyncpa [#allocation3], 1

</llo_original>
